<compile_context>
chip_gen: v7x
topology: tpu7x:2x2x1
jax: 0.10.0
libtpu: 0.0.40
codegen_flags: <defaults>
</compile_context>

<pallas_src>
import math

import jax
import jax.numpy as jnp
import numpy as np
from jax import lax
from jax.experimental import pallas as pl
from jax.experimental.pallas import tpu as pltpu


def _round_up(x, m):
    return (x + m - 1) // m * m


def _vmem_capacity_bytes():
    """Physical VMEM per TensorCore; conservative fallback = v7x (64 MiB)."""
    try:
        info = pltpu.get_tpu_info()
        for name in ("vmem_capacity_bytes", "vmem_bytes", "vmem_size_bytes"):
            v = getattr(info, name, None)
            if v:
                return int(v)
    except Exception:
        pass
    return 64 * 1024 * 1024


# ---------------------------------------------------------------------------
# In-kernel helpers
# ---------------------------------------------------------------------------

def _store_score_slice(o_ref, scores_sb, s_blk, n_s):
    """Write a (S_blk, B_blk) score slice into the lane-dense (B_blk, S_pad) block."""
    scores_bs = jnp.transpose(scores_sb)            # (B_blk, S_blk) - tiny XLU transpose
    if n_s == 1:
        o_ref[:, 0:s_blk] = scores_bs               # static slice (small-S path)
    else:
        si = pl.program_id(1)
        start = pl.multiple_of(si * s_blk, s_blk)   # s_blk is a multiple of 128 here
        o_ref[:, pl.ds(start, s_blk)] = scores_bs


def _finalize_softmax(o_ref, m_ref, seq_len):
    """Mask (lane padding + user mask) and softmax the resident (B_blk, S_pad) block."""
    scores = o_ref[...]                             # (B_blk, S_pad) f32
    col = lax.broadcasted_iota(jnp.int32, scores.shape, 1)
    # Columns >= seq_len are lane padding / ragged-tail garbage: force to -inf so
    # they get exactly zero probability and never perturb the real columns.
    scores = jnp.where(col >= seq_len, -jnp.inf, scores)
    if m_ref is not None:
        scores = jnp.where(m_ref[...] != 0, jnp.float32(-1e20), scores)
    m = jnp.max(scores, axis=-1, keepdims=True)
    e = jnp.exp(scores - m)
    # Full-precision divide kept on purpose (tight numerical match with reference).
    o_ref[...] = e / jnp.sum(e, axis=-1, keepdims=True)


# ---------------------------------------------------------------------------
# Kernel factories (static config closed over: seq_len, S block, #S blocks, mask?)
# ---------------------------------------------------------------------------

def _make_dot_kernel(seq_len, s_blk, n_s, has_mask):
    """score[s,b] = enc[s,b,:] . u[b,:]  — used for both 'dot' and 'general'
    (for 'general' the wrapper pre-computes u = hidden @ W)."""
    def kernel(*refs):
        if has_mask:
            u_ref, e_ref, m_ref, o_ref = refs
        else:
            u_ref, e_ref, o_ref = refs
            m_ref = None
        s_sb = jnp.sum(e_ref[...] * u_ref[...][None, :, :], axis=-1)   # (S_blk, B_blk)
        _store_score_slice(o_ref, s_sb, s_blk, n_s)

        @pl.when(pl.program_id(1) == n_s - 1)
        def _():
            _finalize_softmax(o_ref, m_ref, seq_len)
    return kernel


def _make_concat_kernel(seq_len, s_blk, n_s, has_mask):
    """energy = tanh(enc @ We^T + eh); score = v . energy.
    eh = hidden @ Wh^T + b is pre-computed in the wrapper."""
    def kernel(*refs):
        if has_mask:
            eh_ref, e_ref, we_ref, v_ref, m_ref, o_ref = refs
        else:
            eh_ref, e_ref, we_ref, v_ref, o_ref = refs
            m_ref = None
        # Single non-batched contraction over H -> one dot_general with
        # M = S_blk*B_blk on the MXU.
        ee = lax.dot_general(e_ref[...], we_ref[...],
                             dimension_numbers=(((2,), (0,)), ((), ())),
                             preferred_element_type=jnp.float32)       # (S_blk, B_blk, H)
        energy = jnp.tanh(ee + eh_ref[...][None, :, :])
        s_sb = jnp.sum(v_ref[...][None, :, :] * energy, axis=-1)       # (S_blk, B_blk)
        _store_score_slice(o_ref, s_sb, s_blk, n_s)

        @pl.when(pl.program_id(1) == n_s - 1)
        def _():
            _finalize_softmax(o_ref, m_ref, seq_len)
    return kernel


# ---------------------------------------------------------------------------
# Wrapper
# ---------------------------------------------------------------------------

class AttnPallas:
    """Pallas port of the PyTorch `Attn` module."""

    def __init__(self, method, hidden_size, key):
        if method not in ("dot", "general", "concat"):
            raise ValueError(method, "is not an appropriate attention method.")
        self.method = method
        self.hidden_size = hidden_size
        H = hidden_size

        if method == "general":
            kw, kb = jax.random.split(key)
            bound = 1.0 / math.sqrt(H)           # torch.nn.Linear default init
            self.w = jax.random.uniform(kw, (H, H), jnp.float32, -bound, bound)   # (out, in)
            self.b = jax.random.uniform(kb, (H,), jnp.float32, -bound, bound)
        elif method == "concat":
            kw, kb, kv = jax.random.split(key, 3)
            bound = 1.0 / math.sqrt(2 * H)       # in_features = 2H
            self.wc = jax.random.uniform(kw, (H, 2 * H), jnp.float32, -bound, bound)
            self.b = jax.random.uniform(kb, (H,), jnp.float32, -bound, bound)
            self.wh_t = jnp.transpose(self.wc[:, :H])   # (H_in, H_out): hidden half
            self.we_t = jnp.transpose(self.wc[:, H:])   # (H_in, H_out): encoder half
            # TODO(synk): torch.FloatTensor(H) is uninitialized; deterministic init used.
            self.v = jax.random.normal(kv, (H,), jnp.float32)

    # ----------------------------------------------------------------- forward
    def __call__(self, hidden, encoder_outputs, attn_mask=None):
        # hidden: (1, B, H);  encoder_outputs: (S, B, H)  (native PyTorch layout)
        S, B, H = encoder_outputs.shape
        hb = hidden[0]                                           # (B, H)
        has_mask = attn_mask is not None

        # ---- batch blocking -------------------------------------------------
        # Keep b_blk = B (contiguous HBM reads of the (S,B,H) tensor).  Only when
        # B >= 16 do we split into exactly 2 blocks so the v7x megacore can use
        # both TensorCores; harmless (size-1 loop) on v5e/v6e.
        b_blk = B
        if B >= 16:
            cand = _round_up(-(-B // 2), 8)
            if B % cand == 0:
                b_blk = cand
        n_b = B // b_blk

        # ---- per-generation VMEM budget ------------------------------------
        vmem_cap = _vmem_capacity_bytes()
        vmem_limit = int(min(max(int(vmem_cap * 0.75), 32 << 20), 100 << 20))

        b8 = _round_up(b_blk, 8)                   # sublane-padded batch rows
        h_pad = _round_up(H, 128)                  # lane-padded hidden dim
        s_pad_est = _round_up(S, 128)

        resident = 2 * b8 * s_pad_est * 4          # (b_blk, S_pad) f32 output block
        resident += 2 * b8 * h_pad * 4             # hidden / u / eh block
        if has_mask:
            resident += 2 * b8 * s_pad_est         # int8 mask block
        if self.method == "concat":
            resident += 2 * h_pad * h_pad * 4      # resident We^T
            resident += 2 * 8 * h_pad * 4          # resident v
        margin = 4 << 20
        avail = max(vmem_limit - resident - margin, 1 << 20)

        n_stream_bufs = 2                          # enc block double buffering
        if self.method == "concat":
            n_stream_bufs += 2                     # ee + tanh(energy) temporaries
        s_max = avail // (n_stream_bufs * b8 * h_pad * 4)
        s_max = max(8, s_max)
        if s_max >= 128:
            s_max = (s_max // 128) * 128           # lane-dense dynamic score stores
        else:
            s_max = max(8, (s_max // 8) * 8)
        s_blk = int(min(S, s_max))
        n_s = -(-S // s_blk)
        s_pad = _round_up(max(S, n_s * s_blk), 128)   # lane-dense output width

        # ---- block specs -----------------------------------------------------
        row_spec = pl.BlockSpec((b_blk, H), lambda bi, si: (bi, 0))        # resident over S
        e_spec = pl.BlockSpec((s_blk, b_blk, H), lambda bi, si: (si, bi, 0))
        o_spec = pl.BlockSpec((b_blk, s_pad), lambda bi, si: (bi, 0))      # resident over S

        def _const_spec(shape):                    # weights stay resident in VMEM
            return pl.BlockSpec(shape, lambda bi, si: (0,) * len(shape))

        if self.method == "dot":
            kernel = _make_dot_kernel(S, s_blk, n_s, has_mask)
            args = [hb, encoder_outputs]
            in_specs = [row_spec, e_spec]
        elif self.method == "general":
            # Hoisted tiny wrapper matmul: u = hidden @ W (torch W is (out,in)).
            # hidden·bias is a per-row constant -> softmax-invariant -> dropped.
            u = hb @ self.w
            kernel = _make_dot_kernel(S, s_blk, n_s, has_mask)
            args = [u, encoder_outputs]
            in_specs = [row_spec, e_spec]
        else:  # concat
            eh = hb @ self.wh_t + self.b[None, :]                     # (B, H)
            kernel = _make_concat_kernel(S, s_blk, n_s, has_mask)
            args = [eh, encoder_outputs, self.we_t, self.v.reshape(1, H)]
            in_specs = [row_spec, e_spec, _const_spec((H, H)), _const_spec((1, H))]

        if has_mask:
            mask = jnp.pad(attn_mask.astype(jnp.int8), ((0, 0), (0, s_pad - S)))
            args.append(mask)
            in_specs.append(pl.BlockSpec((b_blk, s_pad), lambda bi, si: (bi, 0)))

        out = pl.pallas_call(
            kernel,
            grid=(n_b, n_s),
            in_specs=in_specs,
            out_specs=o_spec,
            out_shape=jax.ShapeDtypeStruct((B, s_pad), jnp.float32),
            compiler_params=pltpu.CompilerParams(
                dimension_semantics=("parallel", "arbitrary"),
                vmem_limit_bytes=vmem_limit,
            ),
        )(*args)

        return out[:, None, :S]                                  # (B, 1, S)

    # ------------------------------------------------------- pure-JAX reference
    def reference(self, hidden, encoder_outputs, attn_mask=None):
        if self.method == "dot":
            energies = jnp.sum(hidden * encoder_outputs, axis=2)            # (S, B)
        elif self.method == "general":
            energy = encoder_outputs @ self.w.T + self.b                     # (S, B, H)
            energies = jnp.sum(hidden * energy, axis=2)
        else:
            hid = jnp.broadcast_to(hidden, encoder_outputs.shape)
            cat = jnp.concatenate([hid, encoder_outputs], axis=2)            # (S, B, 2H)
            energy = jnp.tanh(cat @ self.wc.T + self.b)
            energies = jnp.sum(self.v * energy, axis=2)
        energies = energies.T                                                # (B, S)
        if attn_mask is not None:
            energies = jnp.where(attn_mask, jnp.float32(-1e20), energies)
        return jax.nn.softmax(energies, axis=1)[:, None, :]


# ---------------------------------------------------------------------------
# Main
# ---------------------------------------------------------------------------

if __name__ == "__main__":
    B, S, H = 4, 8, 32
    key = jax.random.PRNGKey(0)
    k_h, k_e, k_m, k_p = jax.random.split(key, 4)

    hidden = jax.random.normal(k_h, (1, B, H), jnp.float32)
    encoder_outputs = jax.random.normal(k_e, (S, B, H), jnp.float32)
    attn_mask = (jax.random.uniform(k_m, (B, S)) > 0.7)          # boolean (B, S) mask

    ok = True
    for method in ("dot", "general", "concat"):
        mod = AttnPallas(method, H, k_p)
        for mask in (attn_mask, None):                           # masked + maskless paths
            out = jax.block_until_ready(mod(hidden, encoder_outputs, mask))
            ref = jax.block_until_ready(mod.reference(hidden, encoder_outputs, mask))
            if out.shape != (B, 1, S):
                ok = False
            if not np.allclose(np.asarray(out), np.asarray(ref), atol=1e-4, rtol=1e-4):
                ok = False

    if ok:
        print("KERNEL_OK")
</pallas_src>

<mosaic_0001>
module attributes {stable_mosaic.version = 11 : i64} {
  func.func @kernel(%arg0: i32, %arg1: i32, %arg2: memref<4x32xf32, #tpu.memory_space<vmem>>, %arg3: memref<8x4x32xf32, #tpu.memory_space<vmem>>, %arg4: memref<4x128xi8, #tpu.memory_space<vmem>>, %arg5: memref<4x128xf32, #tpu.memory_space<vmem>>) attributes {dimension_semantics = [#tpu.dimension_semantics<parallel>, #tpu.dimension_semantics<arbitrary>], iteration_bounds = array<i64: 1, 1>, scalar_prefetch = 0 : i64, scratch_operands = 0 : i64, tpu.core_type = #tpu.core_type<tc>, window_params = [{transform_indices = @transform_0, window_bounds = array<i64: 4, 32>}, {transform_indices = @transform_1, window_bounds = array<i64: 8, 4, 32>}, {transform_indices = @transform_2, window_bounds = array<i64: 4, 128>}, {transform_indices = @transform_3, window_bounds = array<i64: 4, 128>}]} {
    %c0 = arith.constant 0 : index
    %c0_0 = arith.constant 0 : index
    %c0_1 = arith.constant 0 : index
    %0 = vector.load %arg3[%c0, %c0_0, %c0_1] : memref<8x4x32xf32, #tpu.memory_space<vmem>>, vector<8x4x32xf32>
    %c0_2 = arith.constant 0 : index
    %c0_3 = arith.constant 0 : index
    %1 = vector.load %arg2[%c0_2, %c0_3] : memref<4x32xf32, #tpu.memory_space<vmem>>, vector<4x32xf32>
    %2 = vector.shape_cast %1 : vector<4x32xf32> to vector<1x4x32xf32>
    %3 = vector.broadcast %2 : vector<1x4x32xf32> to vector<8x4x32xf32>
    %4 = arith.mulf %0, %3 : vector<8x4x32xf32>
    %cst = arith.constant dense<0.000000e+00> : vector<8x4xf32>
    %5 = vector.multi_reduction <add>, %4, %cst [2] : vector<8x4x32xf32> to vector<8x4xf32>
    %6 = tpu.transpose %5, [1, 0] : vector<8x4xf32> -> vector<4x8xf32>
    %c0_4 = arith.constant 0 : index
    %c0_5 = arith.constant 0 : index
    %7 = vector.load %arg5[%c0_4, %c0_5] : memref<4x128xf32, #tpu.memory_space<vmem>>, vector<4x8xf32>
    tpu.vector_store %arg5[%c0_4, %c0_5], %6 {strides = array<i32>} : memref<4x128xf32, #tpu.memory_space<vmem>>, vector<4x8xf32>,
    %c0_i32 = arith.constant 0 : i32
    %8 = arith.cmpi eq, %arg1, %c0_i32 : i32
    %9 = arith.extui %8 : i1 to i32
    %c0_i32_6 = arith.constant 0 : i32
    %10 = arith.cmpi ne, %9, %c0_i32_6 : i32
    scf.if %10 {
      %c0_7 = arith.constant 0 : index
      %c0_8 = arith.constant 0 : index
      %11 = vector.load %arg5[%c0_7, %c0_8] : memref<4x128xf32, #tpu.memory_space<vmem>>, vector<4x128xf32>
      %12 = tpu.iota {dimensions = array<i32: 1>} : vector<4x128xi32>
      %c8_i32 = arith.constant 8 : i32
      %13 = vector.broadcast %c8_i32 : i32 to vector<4x128xi32>
      %14 = arith.cmpi sge, %12, %13 : vector<4x128xi32>
      %cst_9 = arith.constant 0xFF800000 : f32
      %15 = vector.broadcast %cst_9 : f32 to vector<4x128xf32>
      %16 = arith.select %14, %15, %11 : vector<4x128xi1>, vector<4x128xf32>
      %c0_10 = arith.constant 0 : index
      %c0_11 = arith.constant 0 : index
      %17 = vector.load %arg4[%c0_10, %c0_11] : memref<4x128xi8, #tpu.memory_space<vmem>>, vector<4x128xi8>
      %c0_i8 = arith.constant 0 : i8
      %18 = vector.broadcast %c0_i8 : i8 to vector<4x128xi8>
      %19 = arith.cmpi ne, %17, %18 : vector<4x128xi8>
      %cst_12 = arith.constant -1.000000e+20 : f32
      %20 = vector.broadcast %cst_12 : f32 to vector<4x128xf32>
      %21 = arith.select %19, %20, %16 : vector<4x128xi1>, vector<4x128xf32>
      %cst_13 = arith.constant dense<0xFF800000> : vector<4xf32>
      %22 = vector.multi_reduction <maximumf>, %21, %cst_13 [1] : vector<4x128xf32> to vector<4xf32>
      %23 = vector.shape_cast %22 : vector<4xf32> to vector<4x1xf32>
      %24 = vector.broadcast %23 : vector<4x1xf32> to vector<4x128xf32>
      %25 = arith.subf %21, %24 : vector<4x128xf32>
      %26 = math.exp %25 : vector<4x128xf32>
      %cst_14 = arith.constant dense<0.000000e+00> : vector<4xf32>
      %27 = vector.multi_reduction <add>, %26, %cst_14 [1] : vector<4x128xf32> to vector<4xf32>
      %28 = vector.shape_cast %27 : vector<4xf32> to vector<4x1xf32>
      %29 = vector.broadcast %28 : vector<4x1xf32> to vector<4x128xf32>
      %30 = arith.divf %26, %29 : vector<4x128xf32>
      %c0_15 = arith.constant 0 : index
      %c0_16 = arith.constant 0 : index
      %31 = vector.load %arg5[%c0_15, %c0_16] : memref<4x128xf32, #tpu.memory_space<vmem>>, vector<4x128xf32>
      tpu.vector_store %arg5[%c0_15, %c0_16], %30 {strides = array<i32>} : memref<4x128xf32, #tpu.memory_space<vmem>>, vector<4x128xf32>,
    } else {
    }
    return
  }
  func.func @transform_0(%arg0: i32, %arg1: i32) -> (i32, i32) {
    %c0_i32 = arith.constant 0 : i32
    %c0_i32_0 = arith.constant 0 : i32
    return %arg0, %c0_i32 : i32, i32
  }
  func.func @transform_1(%arg0: i32, %arg1: i32) -> (i32, i32, i32) {
    %c0_i32 = arith.constant 0 : i32
    %c0_i32_0 = arith.constant 0 : i32
    return %arg1, %arg0, %c0_i32 : i32, i32, i32
  }
  func.func @transform_2(%arg0: i32, %arg1: i32) -> (i32, i32) {
    %c0_i32 = arith.constant 0 : i32
    %c0_i32_0 = arith.constant 0 : i32
    return %arg0, %c0_i32 : i32, i32
  }
  func.func @transform_3(%arg0: i32, %arg1: i32) -> (i32, i32) {
    %c0_i32 = arith.constant 0 : i32
    %c0_i32_0 = arith.constant 0 : i32
    return %arg0, %c0_i32 : i32, i32
  }
}

</mosaic_0001>

<llo_original>
// kernel: tpu_custom_call.1
$region0: #{tpu_custom_call.1}
  #allocation0 [shape = 'u32[]', space=smem, size = 0x4, offset = 0x4, fixed_abs, tag = 'smem constant byte address 0x4 - core index']
  #allocation1 [shape = 'u32[144,128]{1,0:T(1,128)}', space=vmem, size = 0x12000, scoped, tag = 'internal scratch']
  %s0 = inlined_call_operand.hbm [shape: f32[4,32], index: 0, kind: input, shape index: {}]
  %s1 = inlined_call_operand.hbm [shape: f32[8,4,32], index: 1, kind: input, shape index: {}]
  %s2 = inlined_call_operand.vmem [shape: s8[4,128], index: 2, kind: input, shape index: {}]
  %s3 = inlined_call_operand.hbm [shape: f32[4,128], index: 3, kind: output, shape index: {}]
  %s4 = sld [smem:[#allocation0]]
  $region34: #{tpu_custom_call.1} parent=0
    _
  %s6 = ssub.s32 1, %s4
  %s7 = scalar_select 0, %s6, %s4
  $region1: #{tpu_custom_call.1} parent=0
    #allocation2 [shape = 'u8[2048]{0}', space=vmem, size = 0x800, scoped, tag = 'input window, operand 0, single buffered']
    #allocation3 [shape = 's32[1]{0}', space=sflag, size = 0x4, scoped, tag = 'scoped memory for tpu_custom_call.1']
    #allocation4 [shape = 's32[1]{0}', space=sflag, size = 0x4, scoped, tag = 'scoped memory for tpu_custom_call.1']
    #allocation5 [shape = 'u8[16384]{0}', space=vmem, size = 0x4000, scoped, tag = 'input window, operand 1, single buffered']
    #allocation6 [shape = 's32[1]{0}', space=sflag, size = 0x4, scoped, tag = 'scoped memory for tpu_custom_call.1']
    #allocation7 [shape = 'u8[2048]{0}', space=vmem, size = 0x800, scoped, tag = 'output window, operand 0, single buffered']
    %8 = vsyncpa [#allocation3], 0
    %9 = vsyncpa [#allocation6], 0
    %10 = vsyncpa [#allocation4], 0
    // Predicated region
    $region2: #{tpu_custom_call.1} parent=1 // pred_check
      _
    $region3: #{tpu_custom_call.1} parent=1 // pred_check_branch
      %12 = sbr.rel (0) target = $region5
    $region4: #{tpu_custom_call.1} parent=1 // pred_region
      %s14 = ssub.s32 64, 64
      %15 = vsyncadd [#allocation3], %s14
      %s17 = sshll.u32 [#allocation2], 4
      %s18 = int_to_ptr.vmem [resolvable:$true] %s17
      %20 = dma.hbm_to_vmem [thread:$0]  %s0, 64, %s18, [#allocation3]
    $region5: #{tpu_custom_call.1} parent=1 // pred_fallthru
      _
    // Predicated region
    $region6: #{tpu_custom_call.1} parent=1 // pred_check
      _
    $region7: #{tpu_custom_call.1} parent=1 // pred_check_branch
      %22 = sbr.rel (0) target = $region9
    $region8: #{tpu_custom_call.1} parent=1 // pred_region
      %s24 = ssub.s32 512, 512
      %25 = vsyncadd [#allocation6], %s24
      %s26 = sshll.u32 [#allocation5], 4
      %s27 = int_to_ptr.vmem [resolvable:$true] %s26
      %32 = dma.hbm_to_vmem [thread:$0]  %s1, 512, %s27, [#allocation6], 64, 64, 4
    $region9: #{tpu_custom_call.1} parent=1 // pred_fallthru
      _
    // Predicated region
    $region10: #{tpu_custom_call.1} parent=1 // pred_check
      _
    $region11: #{tpu_custom_call.1} parent=1 // pred_check_branch
      %34 = sbr.rel (0) target = $region13
    $region12: #{tpu_custom_call.1} parent=1 // pred_region
      _
    $region13: #{tpu_custom_call.1} parent=1 // pred_fallthru
      _
    // Predicated region
    $region14: #{tpu_custom_call.1} parent=1 // pred_check
      _
    $region15: #{tpu_custom_call.1} parent=1 // pred_check_branch
      %36 = sbr.rel (0) target = $region17
    $region16: #{tpu_custom_call.1} parent=1 // pred_region
      %37 = dma.done [#allocation3], 64
    $region17: #{tpu_custom_call.1} parent=1 // pred_fallthru
      _
    // Predicated region
    $region18: #{tpu_custom_call.1} parent=1 // pred_check
      _
    $region19: #{tpu_custom_call.1} parent=1 // pred_check_branch
      %39 = sbr.rel (0) target = $region21
    $region20: #{tpu_custom_call.1} parent=1 // pred_region
      %40 = dma.done [#allocation6], 512
    $region21: #{tpu_custom_call.1} parent=1 // pred_fallthru
      _
    %v43 = vld [vmem:[#allocation5] sm:$0xf]
    %v44 = vld [vmem:[#allocation5 + $0x4] sm:$0xf]
    %v45 = vld [vmem:[#allocation5 + $0x8] sm:$0xf]
    %v46 = vld [vmem:[#allocation5 + $0xc] sm:$0xf]
    %v47 = vld [vmem:[#allocation5 + $0x10] sm:$0xf]
    %v48 = vld [vmem:[#allocation5 + $0x14] sm:$0xf]
    %v49 = vld [vmem:[#allocation5 + $0x18] sm:$0xf]
    %v50 = vld [vmem:[#allocation5 + $0x1c] sm:$0xf]
    %v51 = vld [vmem:[#allocation2] sm:$0xf]
    %v52 = vmul.f32 %v43, %v51
    %v53 = vmul.f32 %v44, %v51
    %v54 = vmul.f32 %v45, %v51
    %v55 = vmul.f32 %v46, %v51
    %v56 = vmul.f32 %v47, %v51
    %v57 = vmul.f32 %v48, %v51
    %v58 = vmul.f32 %v49, %v51
    %v59 = vmul.f32 %v50, %v51
    %vm60 = vcmask 257024
    %v61 = vsel %vm60, %v52, 0.0
    %62 = vadd.xlane.f32.xlu0 %v61
    %v63 = vpop.xlane.xlu0 %62
    %v64 = vsel %vm60, %v53, 0.0
    %65 = vadd.xlane.f32.xlu0 %v64
    %v66 = vpop.xlane.xlu0 %65
    %v67 = vsel %vm60, %v54, 0.0
    %68 = vadd.xlane.f32.xlu0 %v67
    %v69 = vpop.xlane.xlu0 %68
    %v70 = vsel %vm60, %v55, 0.0
    %71 = vadd.xlane.f32.xlu0 %v70
    %v72 = vpop.xlane.xlu0 %71
    %v73 = vsel %vm60, %v56, 0.0
    %74 = vadd.xlane.f32.xlu0 %v73
    %v75 = vpop.xlane.xlu0 %74
    %v76 = vsel %vm60, %v57, 0.0
    %77 = vadd.xlane.f32.xlu0 %v76
    %v78 = vpop.xlane.xlu0 %77
    %v79 = vsel %vm60, %v58, 0.0
    %80 = vadd.xlane.f32.xlu0 %v79
    %v81 = vpop.xlane.xlu0 %80
    %v82 = vsel %vm60, %v59, 0.0
    %83 = vadd.xlane.f32.xlu0 %v82
    %v84 = vpop.xlane.xlu0 %83
    %v93 = vlaneseq
    %v94 = vand.u32 %v93, 127
    %v95 = vlaneseq
    %v96 = vshrl.u32 %v95, 7
    %v97 = vsub.s32 %v94, %v96
    %v98 = vrot.slane %v63, %v97
    %v99 = vlaneseq
    %v100 = vshrl.u32 %v99, 7
    %v101 = vsub.s32 %v94, %v100
    %v102 = vrot.slane %v66, %v101
    %v103 = vlaneseq
    %v104 = vshrl.u32 %v103, 7
    %v105 = vsub.s32 %v94, %v104
    %v106 = vrot.slane %v69, %v105
    %v107 = vlaneseq
    %v108 = vshrl.u32 %v107, 7
    %v109 = vsub.s32 %v94, %v108
    %v110 = vrot.slane %v72, %v109
    %v111 = vlaneseq
    %v112 = vshrl.u32 %v111, 7
    %v113 = vsub.s32 %v94, %v112
    %v114 = vrot.slane %v75, %v113
    %v115 = vlaneseq
    %v116 = vshrl.u32 %v115, 7
    %v117 = vsub.s32 %v94, %v116
    %v118 = vrot.slane %v78, %v117
    %v119 = vlaneseq
    %v120 = vshrl.u32 %v119, 7
    %v121 = vsub.s32 %v94, %v120
    %v122 = vrot.slane %v81, %v121
    %v123 = vlaneseq
    %v124 = vshrl.u32 %v123, 7
    %v125 = vsub.s32 %v94, %v124
    %v126 = vrot.slane %v84, %v125
    %vm127 = vcmask 1041409
    %v128 = vsel %vm127, %v102, %v98
    %vm129 = vcmask 1042434
    %v130 = vsel %vm129, %v106, %v128
    %vm131 = vcmask 1043459
    %v132 = vsel %vm131, %v110, %v130
    %vm133 = vcmask 1044484
    %v134 = vsel %vm133, %v114, %v132
    %vm135 = vcmask 1045509
    %v136 = vsel %vm135, %v118, %v134
    %vm137 = vcmask 1046534
    %v138 = vsel %vm137, %v122, %v136
    %vm139 = vcmask 1047559
    %v140 = vsel %vm139, %v126, %v138
    %142 = vxpose.xlu0.b32.start [1/16] %v140, 128
    %143 = vxpose.xlu0.b32.cont [2/16] 0.0, 128
    %144 = vxpose.xlu0.b32.cont [3/16] 0.0, 128
    %145 = vxpose.xlu0.b32.cont [4/16] 0.0, 128
    %146 = vxpose.xlu0.b32.cont [5/16] 0.0, 128
    %147 = vxpose.xlu0.b32.cont [6/16] 0.0, 128
    %148 = vxpose.xlu0.b32.cont [7/16] 0.0, 128
    %149 = vxpose.xlu0.b32.cont [8/16] 0.0, 128
    %150 = vxpose.xlu0.b32.cont [9/16] 0.0, 128
    %151 = vxpose.xlu0.b32.cont [10/16] 0.0, 128
    %152 = vxpose.xlu0.b32.cont [11/16] 0.0, 128
    %153 = vxpose.xlu0.b32.cont [12/16] 0.0, 128
    %154 = vxpose.xlu0.b32.cont [13/16] 0.0, 128
    %155 = vxpose.xlu0.b32.cont [14/16] 0.0, 128
    %156 = vxpose.xlu0.b32.cont [15/16] 0.0, 128
    %157 = vxpose.xlu0.b32.end [16/16] 0.0, 128
    %v158 = vpop.trf.xlu0
    %v159 = vpop.trf.xlu0
    %v160 = vpop.trf.xlu0
    %v161 = vpop.trf.xlu0
    %v162 = vpop.trf.xlu0
    %v163 = vpop.trf.xlu0
    %v164 = vpop.trf.xlu0
    %v165 = vpop.trf.xlu0
    %v166 = vpop.trf.xlu0
    %v167 = vpop.trf.xlu0
    %v168 = vpop.trf.xlu0
    %v169 = vpop.trf.xlu0
    %v170 = vpop.trf.xlu0
    %v171 = vpop.trf.xlu0
    %v172 = vpop.trf.xlu0
    %v173 = vpop.trf.xlu0
    %vm174 = vcmask 60416
    %175 = vst.msk [vmem:[#allocation7] sm:$0xf] %vm174, %v158
    %p176 = scmp.eq.s32.totalorder 0, 0
    // Predicated region
    $region22: #{tpu_custom_call.1} parent=1 // pred_check
      %p177 = pneg %p176
    $region23: #{tpu_custom_call.1} parent=1 // pred_check_branch
      %179 = sbr.rel (%p177) target = $region25
    $region24: #{tpu_custom_call.1} parent=1 // pred_region
      %v180 = vld [vmem:[#allocation7] sm:$0xf]
      %vm181 = vcmp.ge.s32.totalorder %v94, 8
      %v182 = vsel %vm181, -inf, %v180
      %v183 = vld [vmem:[%s2] sm:$0x1]
      %vm184 = vnez %v183
      %v185 = vsel %vm184, 16843009, 0
      %v186 = vunpack.c.0.s8 %v185
      %vm187 = vcmp.ne.s32.totalorder %v186, 0
      %v188 = vsel %vm187, -1e+20, %v182
      %vm189 = vcmask 1043456
      %v190 = vsel %vm189, %v188, -inf
      %191 = vmax.xlane.f32.xlu0 %v190
      %v192 = vpop.xlane.xlu0 %191
      %v193 = vsub.f32 %v188, %v192
      %v194 = vmul.f32 %v193, 1.442695
      %v195 = vpow.pop %v194
      %v196 = vsel %vm189, %v195, 0.0
      %197 = vadd.xlane.f32.xlu0 %v196
      %v198 = vpop.xlane.xlu0 %197
      %v199 = vrcp.pop %v198
      %v200 = vmul.f32 %v195, %v199
      %201 = vst [vmem:[#allocation7] sm:$0xf] %v200
    $region25: #{tpu_custom_call.1} parent=1 // pred_fallthru
      _
    // Predicated region
    $region26: #{tpu_custom_call.1} parent=1 // pred_check
      _
    $region27: #{tpu_custom_call.1} parent=1 // pred_check_branch
      %203 = sbr.rel (0) target = $region29
    $region28: #{tpu_custom_call.1} parent=1 // pred_region
      %s205 = ssub.s32 64, 64
      %206 = vsyncadd [#allocation4], %s205
      %s208 = sshll.u32 [#allocation7], 4
      %s209 = int_to_ptr.vmem [resolvable:$true] %s208
      %211 = dma.vmem_to_hbm [thread:$0]  %s209, 64, %s3, [#allocation4]
    $region29: #{tpu_custom_call.1} parent=1 // pred_fallthru
      _
    // Predicated region
    $region30: #{tpu_custom_call.1} parent=1 // pred_check
      _
    $region31: #{tpu_custom_call.1} parent=1 // pred_check_branch
      %213 = sbr.rel (0) target = $region33
    $region32: #{tpu_custom_call.1} parent=1 // pred_region
      %214 = dma.done [#allocation4], 64
    $region33: #{tpu_custom_call.1} parent=1 // pred_fallthru
      _
    %215 = vsyncpa [#allocation3], 1
    %216 = vsyncpa [#allocation6], 1
    %217 = vsyncpa [#allocation4], 1

</llo_original>
